<compile_context>
chip_gen: v7x
topology: tpu7x:2x2x1
jax: 0.10.0
libtpu: 0.0.40
codegen_flags: <defaults>
</compile_context>

<pallas_src>
import jax
import jax.numpy as jnp
from jax.experimental import pallas as pl
from jax.experimental.pallas import tpu as pltpu

KH = KW = 3
CIN = 3
COUT = 64


def conv2d_kernel(x_ref, w_ref, b_ref, o_ref):
    # x_ref: (1, H, W*Cin)          bf16  VMEM   (row h, col = w*Cin + c)
    # w_ref: (KH, W*Cin, OW*Cout)   bf16  VMEM   (block-Toeplitz matrix per kh)
    # b_ref: (1, OW*Cout)           f32   VMEM   (bias pre-broadcast over ow)
    # o_ref: (1, OH, OW*Cout)       f32   VMEM   (lane-dense: OW*Cout = 896)
    _, H, _ = x_ref.shape
    OH = H - KH + 1

    # KH accumulating MXU matmuls; bf16 operands, f32 accumulation.
    acc = jnp.dot(x_ref[0, 0:OH, :], w_ref[0],
                  preferred_element_type=jnp.float32)
    for kh in range(1, KH):
        acc = acc + jnp.dot(x_ref[0, kh:kh + OH, :], w_ref[kh],
                            preferred_element_type=jnp.float32)

    # Single bias add + unmasked lane-dense store (no reshape needed).
    o_ref[0] = (acc + b_ref[...]).astype(o_ref.dtype)


def _build_toeplitz_weight(weight, W, OW):
    """[Cout, Cin, KH, KW] -> (KH, W*Cin, OW*Cout) bf16 block-Toeplitz matrices.

    T[kh, w*Cin + c, ow*Cout + co] = weight[co, c, kh, kw]  iff  w == ow + kw, else 0.
    One-time weight packing; lives outside the per-call hot path in a real model.
    """
    w_t = jnp.transpose(weight, (2, 3, 1, 0)).astype(jnp.float32)  # (KH, KW, Cin, Cout)
    rows = jnp.arange(W)[:, None]          # (W, 1)
    cols = jnp.arange(OW)[None, :]         # (1, OW)
    toes = []
    for kh in range(KH):
        t = jnp.zeros((W, CIN, OW, COUT), jnp.float32)
        for kw in range(KW):
            sel = (rows == cols + kw).astype(jnp.float32)          # (W, OW)
            t = t + sel[:, None, :, None] * w_t[kh, kw][None, :, None, :]
        toes.append(t.reshape(W * CIN, OW * COUT))
    return jnp.stack(toes, axis=0).astype(jnp.bfloat16)


def conv2d_pallas(x_nchw, weight, bias):
    """x_nchw: [N, Cin, H, W]; weight: [Cout, Cin, KH, KW]; bias: [Cout].
    Returns [N, Cout, OH, OW] matching torch.nn.Conv2d(3, 64, kernel_size=3)."""
    N, Cin, H, W = x_nchw.shape
    assert Cin == CIN
    OH, OW = H - KH + 1, W - KW + 1

    # NCHW -> (N, H, W*Cin) bf16: denser lanes, half the input DMA bytes.
    x2d = jnp.transpose(x_nchw, (0, 2, 3, 1)).reshape(N, H, W * CIN).astype(jnp.bfloat16)
    # Block-Toeplitz weights: (KH, W*Cin, OW*Cout) = (3, 48, 896) bf16.
    w_toe = _build_toeplitz_weight(weight, W, OW)
    # Bias pre-broadcast across ow: (1, OW*Cout) f32, column order ow*Cout + co.
    b_row = jnp.tile(bias.astype(jnp.float32), OW).reshape(1, OW * COUT)

    out_flat = pl.pallas_call(
        conv2d_kernel,
        out_shape=jax.ShapeDtypeStruct((N, OH, OW * COUT), jnp.float32),
        grid_spec=pltpu.PrefetchScalarGridSpec(
            num_scalar_prefetch=0,
            grid=(N,),
            in_specs=[
                pl.BlockSpec((1, H, W * CIN), lambda n: (n, 0, 0)),
                pl.BlockSpec((KH, W * CIN, OW * COUT), lambda n: (0, 0, 0)),
                pl.BlockSpec((1, OW * COUT), lambda n: (0, 0)),
            ],
            out_specs=pl.BlockSpec((1, OH, OW * COUT), lambda n: (n, 0, 0)),
        ),
        compiler_params=pltpu.CompilerParams(dimension_semantics=("parallel",)),
    )(x2d, w_toe, b_row)

    # (N, OH, OW*Cout) -> NHWC -> NCHW to match the PyTorch module's convention.
    out_nhwc = out_flat.reshape(N, OH, OW, COUT)
    return jnp.transpose(out_nhwc, (0, 3, 1, 2)).astype(x_nchw.dtype)


if __name__ == "__main__":
    key = jax.random.PRNGKey(0)
    kx, kw, kb = jax.random.split(key, 3)

    # Shapes consistent with nn.Conv2d(3, 64, 3): x = [2, 3, 16, 16].
    x = jax.random.normal(kx, (2, CIN, 16, 16), dtype=jnp.float32)
    fan_in = CIN * KH * KW
    bound = 1.0 / (fan_in ** 0.5)
    weight = jax.random.uniform(kw, (COUT, CIN, KH, KW), jnp.float32, -bound, bound)
    bias = jax.random.uniform(kb, (COUT,), jnp.float32, -bound, bound)

    out = conv2d_pallas(x, weight, bias)
    jax.block_until_ready(out)

    # Reference with the same bf16-rounded operands (kernel uses bf16 MXU operands,
    # f32 accumulation), via XLA's conv in PyTorch NCHW/OIHW convention.
    # TODO(synk): an f32 (or bf16x3) matmul path would be needed for bit-parity
    # with a true f32 nn.Conv2d.
    x_bf = x.astype(jnp.bfloat16).astype(jnp.float32)
    w_bf = weight.astype(jnp.bfloat16).astype(jnp.float32)
    ref = jax.lax.conv_general_dilated(
        x_bf, w_bf, window_strides=(1, 1), padding="VALID",
        dimension_numbers=("NCHW", "OIHW", "NCHW"),
    ) + bias[None, :, None, None]

    assert out.shape == (2, COUT, 14, 14)
    assert jnp.allclose(out, ref, atol=1e-3, rtol=1e-3)

    print("KERNEL_OK")
</pallas_src>

<mosaic_0001>
module attributes {stable_mosaic.version = 11 : i64} {
  func.func @conv2d_kernel(%arg0: i32, %arg1: memref<1x16x48xbf16, #tpu.memory_space<vmem>>, %arg2: memref<3x48x896xbf16, #tpu.memory_space<vmem>>, %arg3: memref<1x896xf32, #tpu.memory_space<vmem>>, %arg4: memref<1x14x896xf32, #tpu.memory_space<vmem>>) attributes {dimension_semantics = [#tpu.dimension_semantics<parallel>], iteration_bounds = array<i64: 2>, scalar_prefetch = 0 : i64, scratch_operands = 0 : i64, tpu.core_type = #tpu.core_type<tc>, window_params = [{transform_indices = @transform_0, window_bounds = array<i64: 1, 16, 48>}, {pipeline_mode = #tpu.pipeline_mode<synchronous>, transform_indices = @transform_1, window_bounds = array<i64: 3, 48, 896>}, {pipeline_mode = #tpu.pipeline_mode<synchronous>, transform_indices = @transform_2, window_bounds = array<i64: 1, 896>}, {transform_indices = @transform_3, window_bounds = array<i64: 1, 14, 896>}]} {
    %c0 = arith.constant 0 : index
    %c0_0 = arith.constant 0 : index
    %c0_1 = arith.constant 0 : index
    %0 = vector.load %arg1[%c0, %c0_0, %c0_1] : memref<1x16x48xbf16, #tpu.memory_space<vmem>>, vector<1x14x48xbf16>
    %1 = vector.shape_cast %0 : vector<1x14x48xbf16> to vector<14x48xbf16>
    %c0_2 = arith.constant 0 : index
    %c0_3 = arith.constant 0 : index
    %c0_4 = arith.constant 0 : index
    %2 = vector.load %arg2[%c0_2, %c0_3, %c0_4] : memref<3x48x896xbf16, #tpu.memory_space<vmem>>, vector<1x48x896xbf16>
    %3 = vector.shape_cast %2 : vector<1x48x896xbf16> to vector<48x896xbf16>
    %cst = arith.constant dense<0.000000e+00> : vector<14x896xf32>
    %4 = tpu.matmul %1, %3, %cst {dimension_numbers = #tpu.dot_dimension_numbers<[1], [0], [0], [1], [0, 0, 1, 1], [], []>} : vector<14x48xbf16>, vector<48x896xbf16>, vector<14x896xf32> -> vector<14x896xf32>
    %c0_5 = arith.constant 0 : index
    %c1 = arith.constant 1 : index
    %c0_6 = arith.constant 0 : index
    %5 = vector.load %arg1[%c0_5, %c1, %c0_6] : memref<1x16x48xbf16, #tpu.memory_space<vmem>>, vector<1x14x48xbf16>
    %6 = vector.shape_cast %5 : vector<1x14x48xbf16> to vector<14x48xbf16>
    %c1_7 = arith.constant 1 : index
    %c0_8 = arith.constant 0 : index
    %c0_9 = arith.constant 0 : index
    %7 = vector.load %arg2[%c1_7, %c0_8, %c0_9] : memref<3x48x896xbf16, #tpu.memory_space<vmem>>, vector<1x48x896xbf16>
    %8 = vector.shape_cast %7 : vector<1x48x896xbf16> to vector<48x896xbf16>
    %cst_10 = arith.constant dense<0.000000e+00> : vector<14x896xf32>
    %9 = tpu.matmul %6, %8, %cst_10 {dimension_numbers = #tpu.dot_dimension_numbers<[1], [0], [0], [1], [0, 0, 1, 1], [], []>} : vector<14x48xbf16>, vector<48x896xbf16>, vector<14x896xf32> -> vector<14x896xf32>
    %10 = arith.addf %4, %9 : vector<14x896xf32>
    %c0_11 = arith.constant 0 : index
    %c2 = arith.constant 2 : index
    %c0_12 = arith.constant 0 : index
    %11 = vector.load %arg1[%c0_11, %c2, %c0_12] : memref<1x16x48xbf16, #tpu.memory_space<vmem>>, vector<1x14x48xbf16>
    %12 = vector.shape_cast %11 : vector<1x14x48xbf16> to vector<14x48xbf16>
    %c2_13 = arith.constant 2 : index
    %c0_14 = arith.constant 0 : index
    %c0_15 = arith.constant 0 : index
    %13 = vector.load %arg2[%c2_13, %c0_14, %c0_15] : memref<3x48x896xbf16, #tpu.memory_space<vmem>>, vector<1x48x896xbf16>
    %14 = vector.shape_cast %13 : vector<1x48x896xbf16> to vector<48x896xbf16>
    %cst_16 = arith.constant dense<0.000000e+00> : vector<14x896xf32>
    %15 = tpu.matmul %12, %14, %cst_16 {dimension_numbers = #tpu.dot_dimension_numbers<[1], [0], [0], [1], [0, 0, 1, 1], [], []>} : vector<14x48xbf16>, vector<48x896xbf16>, vector<14x896xf32> -> vector<14x896xf32>
    %16 = arith.addf %10, %15 : vector<14x896xf32>
    %c0_17 = arith.constant 0 : index
    %c0_18 = arith.constant 0 : index
    %17 = vector.load %arg3[%c0_17, %c0_18] : memref<1x896xf32, #tpu.memory_space<vmem>>, vector<1x896xf32>
    %18 = vector.broadcast %17 : vector<1x896xf32> to vector<14x896xf32>
    %19 = arith.addf %16, %18 : vector<14x896xf32>
    %c0_19 = arith.constant 0 : index
    %c0_20 = arith.constant 0 : index
    %c0_21 = arith.constant 0 : index
    %20 = vector.load %arg4[%c0_19, %c0_20, %c0_21] : memref<1x14x896xf32, #tpu.memory_space<vmem>>, vector<1x14x896xf32>
    %21 = vector.shape_cast %20 : vector<1x14x896xf32> to vector<14x896xf32>
    %22 = vector.shape_cast %19 : vector<14x896xf32> to vector<1x14x896xf32>
    tpu.vector_store %arg4[%c0_19, %c0_20, %c0_21], %22 {strides = array<i32>} : memref<1x14x896xf32, #tpu.memory_space<vmem>>, vector<1x14x896xf32>,
    return
  }
  func.func @transform_0(%arg0: i32) -> (i32, i32, i32) {
    %c0_i32 = arith.constant 0 : i32
    %c0_i32_0 = arith.constant 0 : i32
    %c0_i32_1 = arith.constant 0 : i32
    return %arg0, %c0_i32, %c0_i32_0 : i32, i32, i32
  }
  func.func @transform_1(%arg0: i32) -> (i32, i32, i32) {
    %c0_i32 = arith.constant 0 : i32
    %c0_i32_0 = arith.constant 0 : i32
    %c0_i32_1 = arith.constant 0 : i32
    %c0_i32_2 = arith.constant 0 : i32
    return %c0_i32, %c0_i32_0, %c0_i32_1 : i32, i32, i32
  }
  func.func @transform_2(%arg0: i32) -> (i32, i32) {
    %c0_i32 = arith.constant 0 : i32
    %c0_i32_0 = arith.constant 0 : i32
    %c0_i32_1 = arith.constant 0 : i32
    return %c0_i32, %c0_i32_0 : i32, i32
  }
  func.func @transform_3(%arg0: i32) -> (i32, i32, i32) {
    %c0_i32 = arith.constant 0 : i32
    %c0_i32_0 = arith.constant 0 : i32
    %c0_i32_1 = arith.constant 0 : i32
    return %arg0, %c0_i32, %c0_i32_0 : i32, i32, i32
  }
}

</mosaic_0001>

<llo_original>
// kernel: tpu_custom_call.1
$region0: #{tpu_custom_call.1}
  #allocation0 [shape = 'u32[]', space=smem, size = 0x4, offset = 0x4, fixed_abs, tag = 'smem constant byte address 0x4 - core index']
  #allocation1 [shape = 'u32[144,128]{1,0:T(1,128)}', space=vmem, size = 0x12000, scoped, tag = 'internal scratch']
  %s0 = inlined_call_operand.hbm [shape: bf16[2,16,48], index: 0, kind: input, shape index: {}]
  %s1 = inlined_call_operand.hbm [shape: bf16[3,48,896], index: 1, kind: input, shape index: {}]
  %s2 = inlined_call_operand.vmem [shape: f32[1,896], index: 2, kind: input, shape index: {}]
  %s3 = inlined_call_operand.vmem [shape: f32[2,14,896], index: 3, kind: output, shape index: {}]
  %s4 = sld [smem:[#allocation0]]
  $region53: #{tpu_custom_call.1} parent=0
    _
  %s6 = ssub.s32 1, %s4
  %s7 = scalar_select 0, %s6, %s4
  $region1: #{tpu_custom_call.1} parent=0
    #allocation2 [shape = 'u8[8192]{0}', space=vmem, size = 0x2000, scoped, tag = 'input window, operand 0']
    #allocation3 [shape = 's32[2]{0}', space=sflag, size = 0x8, scoped, tag = 'scoped memory for tpu_custom_call.1']
    #allocation4 [shape = 'u8[258048]{0}', space=vmem, size = 0x3f000, scoped, tag = 'input window, operand 1, single buffered']
    #allocation5 [shape = 's32[1]{0}', space=sflag, size = 0x4, scoped, tag = 'scoped memory for tpu_custom_call.1']
    %8 = vsyncpa [#allocation3], 0
    %s9 = scalar_lea.sflag [#allocation3], 1
    %10 = vsyncpa %s9, 0
    %11 = vsyncpa [#allocation5], 0
    loop: start=0, step=1, limit=4
    $region2: #{tpu_custom_call.1} parent=1 // loop_pre_header
      _
    $region3: #{tpu_custom_call.1} parent=1 // loop_header
      %s13 = sphi 0, %s17
      %p14 = scmp.ge.s32.totalorder %s13, 4
      %s23 = sphi 0, %s25
      %s26 = sphi 0, %s23
      %s27 = sphi 0, %s26
      %s43 = sphi 0, %s27
      %s47 = sphi 0, %s47
      %s49 = sphi 0, %s47
      %s50 = sphi 0, %s49
      %s64 = sphi 0, %s50
      %s68 = sphi 0, %s68
      %s70 = sphi 0, %s68
      %s71 = sphi 0, %s70
      %s85 = sphi 0, %s71
      %s91 = sphi 0, %s93
      %s94 = sphi 0, %s91
      %s95 = sphi 0, %s94
      %s111 = sphi 0, %s95
    $region4: #{tpu_custom_call.1} parent=1 // loop_header_branch
      %16 = sbr.rel (%p14) target = $region8
    $region5: #{tpu_custom_call.1} parent=1 // loop_body
      %s18 = ssub.s32 %s13, 1
      %s19 = ssub.s32 %s13, 2
      %s20 = sadd.s32 %s13, 1
      %s21 = ssub.s32 %s13, %s20
      %p22 = scmp.eq.s32.totalorder %s21, 0
      %s24 = sadd.s32 %s23, 1
      %s25 = scalar_select %p22, %s23, %s24
      %p28 = pneg %p22
      %p29 = scmp.eq.s32.totalorder %s13, 1
      %p30 = por %p28, %p29
      %p31 = scmp.ne.s32.totalorder %s23, %s26
      %p32 = scmp.eq.s32.totalorder %s13, 0
      %p33 = por %p31, %p32
      %p34 = scmp.ne.s32.totalorder %s23, %s26
      %p35 = scmp.eq.s32.totalorder %s18, 1
      %p36 = por %p34, %p35
      %p37 = scmp.ne.s32.totalorder %s26, %s27
      %p38 = scmp.eq.s32.totalorder %s18, 0
      %p39 = por %p37, %p38
      %p40 = scmp.ne.s32.totalorder %s26, %s27
      %p41 = scmp.eq.s32.totalorder %s19, 1
      %p42 = por %p40, %p41
      %p44 = scmp.ne.s32.totalorder %s27, %s43
      %p45 = scmp.eq.s32.totalorder %s19, 0
      %p46 = por %p44, %p45
      %s48 = sadd.s32 %s47, 1
      %p51 = scmp.eq.s32.totalorder %s13, 1
      %p52 = scmp.ne.s32.totalorder %s47, %s49
      %p53 = scmp.eq.s32.totalorder %s13, 0
      %p54 = por %p52, %p53
      %p55 = scmp.ne.s32.totalorder %s47, %s49
      %p56 = scmp.eq.s32.totalorder %s18, 1
      %p57 = por %p55, %p56
      %p58 = scmp.ne.s32.totalorder %s49, %s50
      %p59 = scmp.eq.s32.totalorder %s18, 0
      %p60 = por %p58, %p59
      %p61 = scmp.ne.s32.totalorder %s49, %s50
      %p62 = scmp.eq.s32.totalorder %s19, 1
      %p63 = por %p61, %p62
      %p65 = scmp.ne.s32.totalorder %s50, %s64
      %p66 = scmp.eq.s32.totalorder %s19, 0
      %p67 = por %p65, %p66
      %s69 = sadd.s32 %s68, 1
      %p72 = scmp.eq.s32.totalorder %s13, 1
      %p73 = scmp.ne.s32.totalorder %s68, %s70
      %p74 = scmp.eq.s32.totalorder %s13, 0
      %p75 = por %p73, %p74
      %p76 = scmp.ne.s32.totalorder %s68, %s70
      %p77 = scmp.eq.s32.totalorder %s18, 1
      %p78 = por %p76, %p77
      %p79 = scmp.ne.s32.totalorder %s70, %s71
      %p80 = scmp.eq.s32.totalorder %s18, 0
      %p81 = por %p79, %p80
      %p82 = scmp.ne.s32.totalorder %s70, %s71
      %p83 = scmp.eq.s32.totalorder %s19, 1
      %p84 = por %p82, %p83
      %p86 = scmp.ne.s32.totalorder %s71, %s85
      %p87 = scmp.eq.s32.totalorder %s19, 0
      %p88 = por %p86, %p87
      %s89 = ssub.s32 %s13, %s20
      %p90 = scmp.eq.s32.totalorder %s89, 0
      %s92 = sadd.s32 %s91, 1
      %s93 = scalar_select %p90, %s91, %s92
      %p96 = pneg %p90
      %p97 = scmp.eq.s32.totalorder %s13, 1
      %p98 = por %p96, %p97
      %p99 = scmp.ne.s32.totalorder %s91, %s94
      %p100 = scmp.eq.s32.totalorder %s13, 0
      %p101 = por %p99, %p100
      %p102 = scmp.ne.s32.totalorder %s91, %s94
      %p103 = scmp.eq.s32.totalorder %s18, 1
      %p104 = por %p102, %p103
      %p105 = scmp.ne.s32.totalorder %s94, %s95
      %p106 = scmp.eq.s32.totalorder %s18, 0
      %p107 = por %p105, %p106
      %p108 = scmp.ne.s32.totalorder %s94, %s95
      %p109 = scmp.eq.s32.totalorder %s19, 1
      %p110 = por %p108, %p109
      %p112 = scmp.ne.s32.totalorder %s95, %s111
      %p113 = scmp.eq.s32.totalorder %s19, 0
      %p114 = por %p112, %p113
      %p115 = scmp.le.s32.totalorder 1, %s13
      %p116 = scmp.lt.s32.totalorder %s13, 3
      %p117 = pnand %p115, %p116
      %p118 = pneg %p117
      // Predicated region
      $region9: #{tpu_custom_call.1} parent=5 // pred_check
        _
      $region10: #{tpu_custom_call.1} parent=5 // pred_check_branch
        %120 = sbr.rel (%p117) target = $region12
      $region11: #{tpu_custom_call.1} parent=5 // pred_region
        %s121 = ssub.s32 %s13, 1
        // Predicated region
        $region13: #{tpu_custom_call.1} parent=11 // pred_check
          %p122 = pneg %p60
        $region14: #{tpu_custom_call.1} parent=11 // pred_check_branch
          %124 = sbr.rel (%p122) target = $region16
        $region15: #{tpu_custom_call.1} parent=11 // pred_region
          %s126 = ssub.s32 8064, 8064
          %127 = vsyncadd [#allocation5], %s126
          %s128 = sshll.u32 [#allocation4], 4
          %s129 = int_to_ptr.vmem [resolvable:$true] %s128
          %134 = dma.hbm_to_vmem [thread:$0]  %s1, 8064, %s129, [#allocation5], 448, 448, 28
        $region16: #{tpu_custom_call.1} parent=11 // pred_fallthru
          _
        // Predicated region
        $region17: #{tpu_custom_call.1} parent=11 // pred_check
          %p135 = pneg %p81
        $region18: #{tpu_custom_call.1} parent=11 // pred_check_branch
          %137 = sbr.rel (%p135) target = $region20
        $region19: #{tpu_custom_call.1} parent=11 // pred_region
          _
        $region20: #{tpu_custom_call.1} parent=11 // pred_fallthru
          _
      $region12: #{tpu_custom_call.1} parent=5 // pred_fallthru
        _
      %p138 = scmp.lt.s32.totalorder %s13, 2
      // Predicated region
      $region21: #{tpu_custom_call.1} parent=5 // pred_check
        %p139 = pneg %p138
      $region22: #{tpu_custom_call.1} parent=5 // pred_check_branch
        %141 = sbr.rel (%p139) target = $region24
      $region23: #{tpu_custom_call.1} parent=5 // pred_region
        // Predicated region
        $region25: #{tpu_custom_call.1} parent=23 // pred_check
          %p142 = pneg %p33
        $region26: #{tpu_custom_call.1} parent=23 // pred_check_branch
          %144 = sbr.rel (%p142) target = $region28
        $region27: #{tpu_custom_call.1} parent=23 // pred_region
          %s145 = sand.u32 %s23, 1
          %s146 = scalar_lea.sflag [#allocation3], %s145
          %s147 = sand.u32 %s23, 1
          %s148 = smul.addr %s147, 8
          %s149 = scalar_lea.vmem [#allocation2], %s148
          %s151 = ssub.s32 128, 128
          %152 = vsyncadd %s146, %s151
          %s153 = smul.addr %s13, 2
          %s154 = smul.addr %s153, 64
          %s155 = scalar_lea.hbm %s0, %s154
          %s156 = sshll.u32 %s149, 4
          %s157 = int_to_ptr.vmem [resolvable:$true] %s156
          %162 = dma.hbm_to_vmem [thread:$0]  %s155, 128, %s157, %s146, 64, 64, 4
        $region28: #{tpu_custom_call.1} parent=23 // pred_fallthru
          _
      $region24: #{tpu_custom_call.1} parent=5 // pred_fallthru
        _
      %p163 = scmp.le.s32.totalorder 1, %s13
      %p164 = scmp.lt.s32.totalorder %s13, 3
      %p165 = pnand %p163, %p164
      %p166 = pneg %p165
      // Predicated region
      $region29: #{tpu_custom_call.1} parent=5 // pred_check
        _
      $region30: #{tpu_custom_call.1} parent=5 // pred_check_branch
        %168 = sbr.rel (%p165) target = $region32
      $region31: #{tpu_custom_call.1} parent=5 // pred_region
        %s169 = ssub.s32 %s13, 1
        %s170 = sand.u32 %s26, 1
        %s171 = scalar_lea.sflag [#allocation3], %s170
        %s172 = sand.u32 %s26, 1
        %s173 = smul.addr %s172, 8
        %s174 = scalar_lea.vmem [#allocation2], %s173
        // Predicated region
        $region33: #{tpu_custom_call.1} parent=31 // pred_check
          %p175 = pneg %p39
        $region34: #{tpu_custom_call.1} parent=31 // pred_check_branch
          %177 = sbr.rel (%p175) target = $region36
        $region35: #{tpu_custom_call.1} parent=31 // pred_region
          %178 = dma.done %s171, 128
        $region36: #{tpu_custom_call.1} parent=31 // pred_fallthru
          _
        // Predicated region
        $region37: #{tpu_custom_call.1} parent=31 // pred_check
          %p179 = pneg %p60
        $region38: #{tpu_custom_call.1} parent=31 // pred_check_branch
          %181 = sbr.rel (%p179) target = $region40
        $region39: #{tpu_custom_call.1} parent=31 // pred_region
          %182 = dma.done [#allocation5], 8064
        $region40: #{tpu_custom_call.1} parent=31 // pred_fallthru
          _
        %s183 = sand.u32 %s26, 1
        %s184 = scalar_lea.sflag [#allocation3], %s183
        %s185 = sand.u32 %s26, 1
        %s186 = smul.addr %s185, 8
        %s187 = scalar_lea.vmem [#allocation2], %s186
        %p188 = pneg %p39
        %p189 = pneg %p36
        %p190 = pneg %p60
        %p191 = pneg %p57
        %p192 = pneg %p81
        %p193 = pneg %p78
        %p194 = pneg %p107
        %p195 = pneg %p104
        %p196 = scmp.lt.s32.totalorder %s18, 1
        %s197 = scalar_select %p196, %s18, 1
        %s198 = smul.addr %s197, 14
        %s199 = smul.addr %s198, 8
        %s200 = scalar_lea.vmem %s3, %s199
        %p201 = scmp.lt.s32.totalorder %s18, 1
        %s202 = scalar_select %p201, %s18, 1
        %s203 = smul.addr %s202, 14
        %s204 = smul.addr %s203, 8
        %s205 = scalar_lea.vmem %s3, %s204
        %v207 = vld [vmem:[%s174] sm:$0xf]
        %v208 = vld [vmem:[%s174 + $0x4] sm:$0x7]
        %v209 = vld [vmem:[#allocation4] sm:$0xff]
        %v210 = vld [vmem:[#allocation4 + $0x8] sm:$0xff]
        %v211 = vld [vmem:[#allocation4 + $0x10] sm:$0xff]
        %v212 = vld [vmem:[#allocation4 + $0x18] sm:$0xf]
        %v213 = vld [vmem:[#allocation4 + $0x1c] sm:$0xff]
        %v214 = vld [vmem:[#allocation4 + $0x24] sm:$0xff]
        %v215 = vld [vmem:[#allocation4 + $0x2c] sm:$0xff]
        %v216 = vld [vmem:[#allocation4 + $0x34] sm:$0xf]
        %v217 = vld [vmem:[#allocation4 + $0x38] sm:$0xff]
        %v218 = vld [vmem:[#allocation4 + $0x40] sm:$0xff]
        %v219 = vld [vmem:[#allocation4 + $0x48] sm:$0xff]
        %v220 = vld [vmem:[#allocation4 + $0x50] sm:$0xf]
        %v221 = vld [vmem:[#allocation4 + $0x54] sm:$0xff]
        %v222 = vld [vmem:[#allocation4 + $0x5c] sm:$0xff]
        %v223 = vld [vmem:[#allocation4 + $0x64] sm:$0xff]
        %v224 = vld [vmem:[#allocation4 + $0x6c] sm:$0xf]
        %v225 = vld [vmem:[#allocation4 + $0x70] sm:$0xff]
        %v226 = vld [vmem:[#allocation4 + $0x78] sm:$0xff]
        %v227 = vld [vmem:[#allocation4 + $0x80] sm:$0xff]
        %v228 = vld [vmem:[#allocation4 + $0x88] sm:$0xf]
        %v229 = vld [vmem:[#allocation4 + $0x8c] sm:$0xff]
        %v230 = vld [vmem:[#allocation4 + $0x94] sm:$0xff]
        %v231 = vld [vmem:[#allocation4 + $0x9c] sm:$0xff]
        %v232 = vld [vmem:[#allocation4 + $0xa4] sm:$0xf]
        %v233 = vld [vmem:[%s174 + $0x4] sm:$0xf]
        %s234 = scalar_lea.vmem [#allocation4], 168
        %v235 = vld [vmem:[%s234] sm:$0xff]
        %v236 = vld [vmem:[%s234 + $0x8] sm:$0xff]
        %v237 = vld [vmem:[%s234 + $0x10] sm:$0xff]
        %v238 = vld [vmem:[%s234 + $0x18] sm:$0xf]
        %v239 = vld [vmem:[%s234 + $0x1c] sm:$0xff]
        %v240 = vld [vmem:[%s234 + $0x24] sm:$0xff]
        %v241 = vld [vmem:[%s234 + $0x2c] sm:$0xff]
        %v242 = vld [vmem:[%s234 + $0x34] sm:$0xf]
        %v243 = vld [vmem:[%s234 + $0x38] sm:$0xff]
        %v244 = vld [vmem:[%s234 + $0x40] sm:$0xff]
        %v245 = vld [vmem:[%s234 + $0x48] sm:$0xff]
        %v246 = vld [vmem:[%s234 + $0x50] sm:$0xf]
        %v247 = vld [vmem:[%s234 + $0x54] sm:$0xff]
        %v248 = vld [vmem:[%s234 + $0x5c] sm:$0xff]
        %v249 = vld [vmem:[%s234 + $0x64] sm:$0xff]
        %v250 = vld [vmem:[%s234 + $0x6c] sm:$0xf]
        %v251 = vld [vmem:[%s234 + $0x70] sm:$0xff]
        %v252 = vld [vmem:[%s234 + $0x78] sm:$0xff]
        %v253 = vld [vmem:[%s234 + $0x80] sm:$0xff]
        %v254 = vld [vmem:[%s234 + $0x88] sm:$0xf]
        %v255 = vld [vmem:[%s234 + $0x8c] sm:$0xff]
        %v256 = vld [vmem:[%s234 + $0x94] sm:$0xff]
        %v257 = vld [vmem:[%s234 + $0x9c] sm:$0xff]
        %v258 = vld [vmem:[%s234 + $0xa4] sm:$0xf]
        %v261 = vunpack.c.l.b16 %v207
        %v262 = vunpack.c.l.b16 %v233
        %v263 = vpack.c.b16 %v262, %v261
        %v265 = vshrl.u32 %v263, 16
        %v267 = vshll.u32 %v263, 16
        %v269 = vrot.slane %v267, 1
        %v270 = vor.u32 %v265, %v269
        %v295 = vunpack.c.l.b16 %v235
        %v296 = vunpack.c.h.b16 %v235
        %v297 = vunpack.c.l.b16 %v236
        %v298 = vunpack.c.h.b16 %v236
        %v299 = vunpack.c.l.b16 %v237
        %v300 = vunpack.c.h.b16 %v237
        %v301 = vunpack.c.l.b16 %v238
        %v302 = vunpack.c.l.b16 %v239
        %v303 = vunpack.c.h.b16 %v239
        %v304 = vunpack.c.l.b16 %v240
        %v305 = vunpack.c.h.b16 %v240
        %v306 = vunpack.c.l.b16 %v241
        %v307 = vunpack.c.h.b16 %v241
        %v308 = vunpack.c.l.b16 %v242
        %v309 = vunpack.c.l.b16 %v243
        %v310 = vunpack.c.h.b16 %v243
        %v311 = vunpack.c.l.b16 %v244
        %v312 = vunpack.c.h.b16 %v244
        %v313 = vunpack.c.l.b16 %v245
        %v314 = vunpack.c.h.b16 %v245
        %v315 = vunpack.c.l.b16 %v246
        %v316 = vunpack.c.l.b16 %v247
        %v317 = vunpack.c.h.b16 %v247
        %v318 = vunpack.c.l.b16 %v248
        %v319 = vunpack.c.h.b16 %v248
        %v320 = vunpack.c.l.b16 %v249
        %v321 = vunpack.c.h.b16 %v249
        %v322 = vunpack.c.l.b16 %v250
        %v323 = vunpack.c.l.b16 %v251
        %v324 = vunpack.c.h.b16 %v251
        %v325 = vunpack.c.l.b16 %v252
        %v326 = vunpack.c.h.b16 %v252
        %v327 = vunpack.c.l.b16 %v253
        %v328 = vunpack.c.h.b16 %v253
        %v329 = vunpack.c.l.b16 %v254
        %v330 = vunpack.c.l.b16 %v255
        %v331 = vunpack.c.h.b16 %v255
        %v332 = vunpack.c.l.b16 %v256
        %v333 = vunpack.c.h.b16 %v256
        %v334 = vunpack.c.l.b16 %v257
        %v335 = vunpack.c.h.b16 %v257
        %v336 = vunpack.c.l.b16 %v258
        %v337 = vpack.c.b16 %v302, %v295
        %v338 = vpack.c.b16 %v303, %v296
        %v339 = vpack.c.b16 %v304, %v297
        %v340 = vpack.c.b16 %v305, %v298
        %v341 = vpack.c.b16 %v306, %v299
        %v342 = vpack.c.b16 %v307, %v300
        %v343 = vpack.c.b16 %v308, %v301
        %v344 = vpack.c.b16 %v316, %v309
        %v345 = vpack.c.b16 %v317, %v310
        %v346 = vpack.c.b16 %v318, %v311
        %v347 = vpack.c.b16 %v319, %v312
        %v348 = vpack.c.b16 %v320, %v313
        %v349 = vpack.c.b16 %v321, %v314
        %v350 = vpack.c.b16 %v322, %v315
        %v351 = vpack.c.b16 %v330, %v323
        %v352 = vpack.c.b16 %v331, %v324
        %v353 = vpack.c.b16 %v332, %v325
        %v354 = vpack.c.b16 %v333, %v326
        %v355 = vpack.c.b16 %v334, %v327
        %v356 = vpack.c.b16 %v335, %v328
        %v357 = vpack.c.b16 %v336, %v329
        %vm379 = vcmask 392192
        %v381 = vsel %vm379, %v270, 0
        %383 = vmatprep.subr.bf16.mxu0 %v338
        %384 = vmatpush1.bf16.msra.mxu0 %v337
        %385 = vmatprep.subr.bf16.mxu0 %v345
        %386 = vmatpush1.bf16.msra.mxu0 %v344
        %387 = vmatprep.subr.bf16.mxu0 %v352
        %388 = vmatpush1.bf16.msra.mxu0 %v351
        %389 = vmatprep.subr.bf16.mxu0 0
        %390 = vmatpush1.bf16.msra.mxu0 0
        %391 = vmatprep.subr.bf16.mxu0 0
        %392 = vmatpush1.bf16.msra.mxu0 0
        %393 = vmatprep.subr.bf16.mxu0 0
        %394 = vmatpush1.bf16.msra.mxu0 0
        %395 = vmatprep.subr.bf16.mxu0 0
        %396 = vmatpush1.bf16.msra.mxu0 0
        %397 = vmatprep.subr.bf16.mxu0 0
        %398 = vmatpush1.bf16.msra.mxu0 0
        %399 = vmatprep.subr.bf16.mxu0 0
        %400 = vmatpush1.bf16.msra.mxu0 0
        %401 = vmatprep.subr.bf16.mxu0 0
        %402 = vmatpush1.bf16.msra.mxu0 0
        %403 = vmatprep.subr.bf16.mxu0 0
        %404 = vmatpush1.bf16.msra.mxu0 0
        %405 = vmatprep.subr.bf16.mxu0 0
        %406 = vmatpush1.bf16.msra.mxu0 0
        %407 = vmatprep.subr.bf16.mxu0 0
        %408 = vmatpush1.bf16.msra.mxu0 0
        %409 = vmatprep.subr.bf16.mxu0 0
        %410 = vmatpush1.bf16.msra.mxu0 0
        %411 = vmatprep.subr.bf16.mxu0 0
        %412 = vmatpush1.bf16.msra.mxu0 0
        %413 = vmatprep.subr.bf16.mxu0 0
        %414 = vmatpush1.bf16.msra.mxu0 0
        %415 = vmatprep.mubr.bf16.mxu0 0
        %416 = vmatmul.mubr.bf16.gmra.mrb[0].mxu0 %v381
        %v417 = vpop.f32.mrb[0].mxu0
        %v418 = vadd.f32 0.0, %v417
        %v419 = vpop.f32.mrb[0].mxu0
        %v420 = vadd.f32 0.0, %v419
        %v421 = vpop.f32.mrb[0].mxu0
        %v422 = vadd.f32 0.0, %v421
        %v423 = vpop.f32.mrb[0].mxu0
        %v424 = vadd.f32 0.0, %v423
        %425 = vdwg.mxu0
        %426 = vmatprep.subr.bf16.mxu0 %v340
        %427 = vmatpush1.bf16.msra.mxu0 %v339
        %428 = vmatprep.subr.bf16.mxu0 %v347
        %429 = vmatpush1.bf16.msra.mxu0 %v346
        %430 = vmatprep.subr.bf16.mxu0 %v354
        %431 = vmatpush1.bf16.msra.mxu0 %v353
        %432 = vmatprep.subr.bf16.mxu0 0
        %433 = vmatpush1.bf16.msra.mxu0 0
        %434 = vmatprep.subr.bf16.mxu0 0
        %435 = vmatpush1.bf16.msra.mxu0 0
        %436 = vmatprep.subr.bf16.mxu0 0
        %437 = vmatpush1.bf16.msra.mxu0 0
        %438 = vmatprep.subr.bf16.mxu0 0
        %439 = vmatpush1.bf16.msra.mxu0 0
        %440 = vmatprep.subr.bf16.mxu0 0
        %441 = vmatpush1.bf16.msra.mxu0 0
        %442 = vmatprep.subr.bf16.mxu0 0
        %443 = vmatpush1.bf16.msra.mxu0 0
        %444 = vmatprep.subr.bf16.mxu0 0
        %445 = vmatpush1.bf16.msra.mxu0 0
        %446 = vmatprep.subr.bf16.mxu0 0
        %447 = vmatpush1.bf16.msra.mxu0 0
        %448 = vmatprep.subr.bf16.mxu0 0
        %449 = vmatpush1.bf16.msra.mxu0 0
        %450 = vmatprep.subr.bf16.mxu0 0
        %451 = vmatpush1.bf16.msra.mxu0 0
        %452 = vmatprep.subr.bf16.mxu0 0
        %453 = vmatpush1.bf16.msra.mxu0 0
        %454 = vmatprep.subr.bf16.mxu0 0
        %455 = vmatpush1.bf16.msra.mxu0 0
        %456 = vmatprep.subr.bf16.mxu0 0
        %457 = vmatpush1.bf16.msra.mxu0 0
        %458 = vmatprep.mubr.bf16.mxu0 0
        %459 = vmatmul.mubr.bf16.gmra.mrb[0].mxu0 %v381
        %v460 = vpop.f32.mrb[0].mxu0
        %v461 = vadd.f32 0.0, %v460
        %v462 = vpop.f32.mrb[0].mxu0
        %v463 = vadd.f32 0.0, %v462
        %v464 = vpop.f32.mrb[0].mxu0
        %v465 = vadd.f32 0.0, %v464
        %v466 = vpop.f32.mrb[0].mxu0
        %v467 = vadd.f32 0.0, %v466
        %468 = vdwg.mxu0
        %469 = vmatprep.subr.bf16.mxu0 %v342
        %470 = vmatpush1.bf16.msra.mxu0 %v341
        %471 = vmatprep.subr.bf16.mxu0 %v349
        %472 = vmatpush1.bf16.msra.mxu0 %v348
        %473 = vmatprep.subr.bf16.mxu0 %v356
        %474 = vmatpush1.bf16.msra.mxu0 %v355
        %475 = vmatprep.subr.bf16.mxu0 0
        %476 = vmatpush1.bf16.msra.mxu0 0
        %477 = vmatprep.subr.bf16.mxu0 0
        %478 = vmatpush1.bf16.msra.mxu0 0
        %479 = vmatprep.subr.bf16.mxu0 0
        %480 = vmatpush1.bf16.msra.mxu0 0
        %481 = vmatprep.subr.bf16.mxu0 0
        %482 = vmatpush1.bf16.msra.mxu0 0
        %483 = vmatprep.subr.bf16.mxu0 0
        %484 = vmatpush1.bf16.msra.mxu0 0
        %485 = vmatprep.subr.bf16.mxu0 0
        %486 = vmatpush1.bf16.msra.mxu0 0
        %487 = vmatprep.subr.bf16.mxu0 0
        %488 = vmatpush1.bf16.msra.mxu0 0
        %489 = vmatprep.subr.bf16.mxu0 0
        %490 = vmatpush1.bf16.msra.mxu0 0
        %491 = vmatprep.subr.bf16.mxu0 0
        %492 = vmatpush1.bf16.msra.mxu0 0
        %493 = vmatprep.subr.bf16.mxu0 0
        %494 = vmatpush1.bf16.msra.mxu0 0
        %495 = vmatprep.subr.bf16.mxu0 0
        %496 = vmatpush1.bf16.msra.mxu0 0
        %497 = vmatprep.subr.bf16.mxu0 0
        %498 = vmatpush1.bf16.msra.mxu0 0
        %499 = vmatprep.subr.bf16.mxu0 0
        %500 = vmatpush1.bf16.msra.mxu0 0
        %501 = vmatprep.mubr.bf16.mxu0 0
        %502 = vmatmul.mubr.bf16.gmra.mrb[0].mxu0 %v381
        %v503 = vpop.f32.mrb[0].mxu0
        %v504 = vadd.f32 0.0, %v503
        %v505 = vpop.f32.mrb[0].mxu0
        %v506 = vadd.f32 0.0, %v505
        %v507 = vpop.f32.mrb[0].mxu0
        %v508 = vadd.f32 0.0, %v507
        %v509 = vpop.f32.mrb[0].mxu0
        %v510 = vadd.f32 0.0, %v509
        %511 = vdwg.mxu0
        %512 = vmatprep.subr.bf16.mxu0 0
        %513 = vmatpush1.bf16.msra.mxu0 %v343
        %514 = vmatprep.subr.bf16.mxu0 0
        %515 = vmatpush1.bf16.msra.mxu0 %v350
        %516 = vmatprep.subr.bf16.mxu0 0
        %517 = vmatpush1.bf16.msra.mxu0 %v357
        %518 = vmatprep.subr.bf16.mxu0 0
        %519 = vmatpush1.bf16.msra.mxu0 0
        %520 = vmatprep.subr.bf16.mxu0 0
        %521 = vmatpush1.bf16.msra.mxu0 0
        %522 = vmatprep.subr.bf16.mxu0 0
        %523 = vmatpush1.bf16.msra.mxu0 0
        %524 = vmatprep.subr.bf16.mxu0 0
        %525 = vmatpush1.bf16.msra.mxu0 0
        %526 = vmatprep.subr.bf16.mxu0 0
        %527 = vmatpush1.bf16.msra.mxu0 0
        %528 = vmatprep.subr.bf16.mxu0 0
        %529 = vmatpush1.bf16.msra.mxu0 0
        %530 = vmatprep.subr.bf16.mxu0 0
        %531 = vmatpush1.bf16.msra.mxu0 0
        %532 = vmatprep.subr.bf16.mxu0 0
        %533 = vmatpush1.bf16.msra.mxu0 0
        %534 = vmatprep.subr.bf16.mxu0 0
        %535 = vmatpush1.bf16.msra.mxu0 0
        %536 = vmatprep.subr.bf16.mxu0 0
        %537 = vmatpush1.bf16.msra.mxu0 0
        %538 = vmatprep.subr.bf16.mxu0 0
        %539 = vmatpush1.bf16.msra.mxu0 0
        %540 = vmatprep.subr.bf16.mxu0 0
        %541 = vmatpush1.bf16.msra.mxu0 0
        %542 = vmatprep.subr.bf16.mxu0 0
        %543 = vmatpush1.bf16.msra.mxu0 0
        %544 = vmatprep.mubr.bf16.mxu0 0
        %545 = vmatmul.mubr.bf16.gmra.mrb[0].mxu0 %v381
        %v546 = vpop.f32.mrb[0].mxu0
        %v547 = vadd.f32 0.0, %v546
        %v548 = vpop.f32.mrb[0].mxu0
        %v549 = vpop.f32.mrb[0].mxu0
        %v550 = vadd.f32 0.0, %v549
        %v551 = vpop.f32.mrb[0].mxu0
        %552 = vdwg.mxu0
        %v554 = vunpack.c.l.b16 %v208
        %v555 = vpack.c.b16 %v554, %v261
        %v580 = vunpack.c.l.b16 %v209
        %v581 = vunpack.c.h.b16 %v209
        %v582 = vunpack.c.l.b16 %v210
        %v583 = vunpack.c.h.b16 %v210
        %v584 = vunpack.c.l.b16 %v211
        %v585 = vunpack.c.h.b16 %v211
        %v586 = vunpack.c.l.b16 %v212
        %v587 = vunpack.c.l.b16 %v213
        %v588 = vunpack.c.h.b16 %v213
        %v589 = vunpack.c.l.b16 %v214
        %v590 = vunpack.c.h.b16 %v214
        %v591 = vunpack.c.l.b16 %v215
        %v592 = vunpack.c.h.b16 %v215
        %v593 = vunpack.c.l.b16 %v216
        %v594 = vunpack.c.l.b16 %v217
        %v595 = vunpack.c.h.b16 %v217
        %v596 = vunpack.c.l.b16 %v218
        %v597 = vunpack.c.h.b16 %v218
        %v598 = vunpack.c.l.b16 %v219
        %v599 = vunpack.c.h.b16 %v219
        %v600 = vunpack.c.l.b16 %v220
        %v601 = vunpack.c.l.b16 %v221
        %v602 = vunpack.c.h.b16 %v221
        %v603 = vunpack.c.l.b16 %v222
        %v604 = vunpack.c.h.b16 %v222
        %v605 = vunpack.c.l.b16 %v223
        %v606 = vunpack.c.h.b16 %v223
        %v607 = vunpack.c.l.b16 %v224
        %v608 = vunpack.c.l.b16 %v225
        %v609 = vunpack.c.h.b16 %v225
        %v610 = vunpack.c.l.b16 %v226
        %v611 = vunpack.c.h.b16 %v226
        %v612 = vunpack.c.l.b16 %v227
        %v613 = vunpack.c.h.b16 %v227
        %v614 = vunpack.c.l.b16 %v228
        %v615 = vunpack.c.l.b16 %v229
        %v616 = vunpack.c.h.b16 %v229
        %v617 = vunpack.c.l.b16 %v230
        %v618 = vunpack.c.h.b16 %v230
        %v619 = vunpack.c.l.b16 %v231
        %v620 = vunpack.c.h.b16 %v231
        %v621 = vunpack.c.l.b16 %v232
        %v622 = vpack.c.b16 %v587, %v580
        %v623 = vpack.c.b16 %v588, %v581
        %v624 = vpack.c.b16 %v589, %v582
        %v625 = vpack.c.b16 %v590, %v583
        %v626 = vpack.c.b16 %v591, %v584
        %v627 = vpack.c.b16 %v592, %v585
        %v628 = vpack.c.b16 %v593, %v586
        %v629 = vpack.c.b16 %v601, %v594
        %v630 = vpack.c.b16 %v602, %v595
        %v631 = vpack.c.b16 %v603, %v596
        %v632 = vpack.c.b16 %v604, %v597
        %v633 = vpack.c.b16 %v605, %v598
        %v634 = vpack.c.b16 %v606, %v599
        %v635 = vpack.c.b16 %v607, %v600
        %v636 = vpack.c.b16 %v615, %v608
        %v637 = vpack.c.b16 %v616, %v609
        %v638 = vpack.c.b16 %v617, %v610
        %v639 = vpack.c.b16 %v618, %v611
        %v640 = vpack.c.b16 %v619, %v612
        %v641 = vpack.c.b16 %v620, %v613
        %v642 = vpack.c.b16 %v621, %v614
        %v665 = vsel %vm379, %v555, 0
        %667 = vmatprep.subr.bf16.mxu0 %v623
        %668 = vmatpush1.bf16.msra.mxu0 %v622
        %669 = vmatprep.subr.bf16.mxu0 %v630
        %670 = vmatpush1.bf16.msra.mxu0 %v629
        %671 = vmatprep.subr.bf16.mxu0 %v637
        %672 = vmatpush1.bf16.msra.mxu0 %v636
        %673 = vmatprep.subr.bf16.mxu0 0
        %674 = vmatpush1.bf16.msra.mxu0 0
        %675 = vmatprep.subr.bf16.mxu0 0
        %676 = vmatpush1.bf16.msra.mxu0 0
        %677 = vmatprep.subr.bf16.mxu0 0
        %678 = vmatpush1.bf16.msra.mxu0 0
        %679 = vmatprep.subr.bf16.mxu0 0
        %680 = vmatpush1.bf16.msra.mxu0 0
        %681 = vmatprep.subr.bf16.mxu0 0
        %682 = vmatpush1.bf16.msra.mxu0 0
        %683 = vmatprep.subr.bf16.mxu0 0
        %684 = vmatpush1.bf16.msra.mxu0 0
        %685 = vmatprep.subr.bf16.mxu0 0
        %686 = vmatpush1.bf16.msra.mxu0 0
        %687 = vmatprep.subr.bf16.mxu0 0
        %688 = vmatpush1.bf16.msra.mxu0 0
        %689 = vmatprep.subr.bf16.mxu0 0
        %690 = vmatpush1.bf16.msra.mxu0 0
        %691 = vmatprep.subr.bf16.mxu0 0
        %692 = vmatpush1.bf16.msra.mxu0 0
        %693 = vmatprep.subr.bf16.mxu0 0
        %694 = vmatpush1.bf16.msra.mxu0 0
        %695 = vmatprep.subr.bf16.mxu0 0
        %696 = vmatpush1.bf16.msra.mxu0 0
        %697 = vmatprep.subr.bf16.mxu0 0
        %698 = vmatpush1.bf16.msra.mxu0 0
        %699 = vmatprep.mubr.bf16.mxu0 0
        %700 = vmatmul.mubr.bf16.gmra.mrb[0].mxu0 %v665
        %v701 = vpop.f32.mrb[0].mxu0
        %v702 = vadd.f32 %v418, %v701
        %v703 = vpop.f32.mrb[0].mxu0
        %v704 = vadd.f32 %v420, %v703
        %v705 = vpop.f32.mrb[0].mxu0
        %v706 = vadd.f32 %v422, %v705
        %v707 = vpop.f32.mrb[0].mxu0
        %v708 = vadd.f32 %v424, %v707
        %709 = vdwg.mxu0
        %710 = vmatprep.subr.bf16.mxu0 %v625
        %711 = vmatpush1.bf16.msra.mxu0 %v624
        %712 = vmatprep.subr.bf16.mxu0 %v632
        %713 = vmatpush1.bf16.msra.mxu0 %v631
        %714 = vmatprep.subr.bf16.mxu0 %v639
        %715 = vmatpush1.bf16.msra.mxu0 %v638
        %716 = vmatprep.subr.bf16.mxu0 0
        %717 = vmatpush1.bf16.msra.mxu0 0
        %718 = vmatprep.subr.bf16.mxu0 0
        %719 = vmatpush1.bf16.msra.mxu0 0
        %720 = vmatprep.subr.bf16.mxu0 0
        %721 = vmatpush1.bf16.msra.mxu0 0
        %722 = vmatprep.subr.bf16.mxu0 0
        %723 = vmatpush1.bf16.msra.mxu0 0
        %724 = vmatprep.subr.bf16.mxu0 0
        %725 = vmatpush1.bf16.msra.mxu0 0
        %726 = vmatprep.subr.bf16.mxu0 0
        %727 = vmatpush1.bf16.msra.mxu0 0
        %728 = vmatprep.subr.bf16.mxu0 0
        %729 = vmatpush1.bf16.msra.mxu0 0
        %730 = vmatprep.subr.bf16.mxu0 0
        %731 = vmatpush1.bf16.msra.mxu0 0
        %732 = vmatprep.subr.bf16.mxu0 0
        %733 = vmatpush1.bf16.msra.mxu0 0
        %734 = vmatprep.subr.bf16.mxu0 0
        %735 = vmatpush1.bf16.msra.mxu0 0
        %736 = vmatprep.subr.bf16.mxu0 0
        %737 = vmatpush1.bf16.msra.mxu0 0
        %738 = vmatprep.subr.bf16.mxu0 0
        %739 = vmatpush1.bf16.msra.mxu0 0
        %740 = vmatprep.subr.bf16.mxu0 0
        %741 = vmatpush1.bf16.msra.mxu0 0
        %742 = vmatprep.mubr.bf16.mxu0 0
        %743 = vmatmul.mubr.bf16.gmra.mrb[0].mxu0 %v665
        %v744 = vpop.f32.mrb[0].mxu0
        %v745 = vadd.f32 %v461, %v744
        %v746 = vpop.f32.mrb[0].mxu0
        %v747 = vadd.f32 %v463, %v746
        %v748 = vpop.f32.mrb[0].mxu0
        %v749 = vadd.f32 %v465, %v748
        %v750 = vpop.f32.mrb[0].mxu0
        %v751 = vadd.f32 %v467, %v750
        %752 = vdwg.mxu0
        %753 = vmatprep.subr.bf16.mxu0 %v627
        %754 = vmatpush1.bf16.msra.mxu0 %v626
        %755 = vmatprep.subr.bf16.mxu0 %v634
        %756 = vmatpush1.bf16.msra.mxu0 %v633
        %757 = vmatprep.subr.bf16.mxu0 %v641
        %758 = vmatpush1.bf16.msra.mxu0 %v640
        %759 = vmatprep.subr.bf16.mxu0 0
        %760 = vmatpush1.bf16.msra.mxu0 0
        %761 = vmatprep.subr.bf16.mxu0 0
        %762 = vmatpush1.bf16.msra.mxu0 0
        %763 = vmatprep.subr.bf16.mxu0 0
        %764 = vmatpush1.bf16.msra.mxu0 0
        %765 = vmatprep.subr.bf16.mxu0 0
        %766 = vmatpush1.bf16.msra.mxu0 0
        %767 = vmatprep.subr.bf16.mxu0 0
        %768 = vmatpush1.bf16.msra.mxu0 0
        %769 = vmatprep.subr.bf16.mxu0 0
        %770 = vmatpush1.bf16.msra.mxu0 0
        %771 = vmatprep.subr.bf16.mxu0 0
        %772 = vmatpush1.bf16.msra.mxu0 0
        %773 = vmatprep.subr.bf16.mxu0 0
        %774 = vmatpush1.bf16.msra.mxu0 0
        %775 = vmatprep.subr.bf16.mxu0 0
        %776 = vmatpush1.bf16.msra.mxu0 0
        %777 = vmatprep.subr.bf16.mxu0 0
        %778 = vmatpush1.bf16.msra.mxu0 0
        %779 = vmatprep.subr.bf16.mxu0 0
        %780 = vmatpush1.bf16.msra.mxu0 0
        %781 = vmatprep.subr.bf16.mxu0 0
        %782 = vmatpush1.bf16.msra.mxu0 0
        %783 = vmatprep.subr.bf16.mxu0 0
        %784 = vmatpush1.bf16.msra.mxu0 0
        %785 = vmatprep.mubr.bf16.mxu0 0
        %786 = vmatmul.mubr.bf16.gmra.mrb[0].mxu0 %v665
        %v787 = vpop.f32.mrb[0].mxu0
        %v788 = vadd.f32 %v504, %v787
        %v789 = vpop.f32.mrb[0].mxu0
        %v790 = vadd.f32 %v506, %v789
        %v791 = vpop.f32.mrb[0].mxu0
        %v792 = vadd.f32 %v508, %v791
        %v793 = vpop.f32.mrb[0].mxu0
        %v794 = vadd.f32 %v510, %v793
        %795 = vdwg.mxu0
        %796 = vmatprep.subr.bf16.mxu0 0
        %797 = vmatpush1.bf16.msra.mxu0 %v628
        %798 = vmatprep.subr.bf16.mxu0 0
        %799 = vmatpush1.bf16.msra.mxu0 %v635
        %800 = vmatprep.subr.bf16.mxu0 0
        %801 = vmatpush1.bf16.msra.mxu0 %v642
        %802 = vmatprep.subr.bf16.mxu0 0
        %803 = vmatpush1.bf16.msra.mxu0 0
        %804 = vmatprep.subr.bf16.mxu0 0
        %805 = vmatpush1.bf16.msra.mxu0 0
        %806 = vmatprep.subr.bf16.mxu0 0
        %807 = vmatpush1.bf16.msra.mxu0 0
        %808 = vmatprep.subr.bf16.mxu0 0
        %809 = vmatpush1.bf16.msra.mxu0 0
        %810 = vmatprep.subr.bf16.mxu0 0
        %811 = vmatpush1.bf16.msra.mxu0 0
        %812 = vmatprep.subr.bf16.mxu0 0
        %813 = vmatpush1.bf16.msra.mxu0 0
        %814 = vmatprep.subr.bf16.mxu0 0
        %815 = vmatpush1.bf16.msra.mxu0 0
        %816 = vmatprep.subr.bf16.mxu0 0
        %817 = vmatpush1.bf16.msra.mxu0 0
        %818 = vmatprep.subr.bf16.mxu0 0
        %819 = vmatpush1.bf16.msra.mxu0 0
        %820 = vmatprep.subr.bf16.mxu0 0
        %821 = vmatpush1.bf16.msra.mxu0 0
        %822 = vmatprep.subr.bf16.mxu0 0
        %823 = vmatpush1.bf16.msra.mxu0 0
        %824 = vmatprep.subr.bf16.mxu0 0
        %825 = vmatpush1.bf16.msra.mxu0 0
        %826 = vmatprep.subr.bf16.mxu0 0
        %827 = vmatpush1.bf16.msra.mxu0 0
        %828 = vmatprep.mubr.bf16.mxu0 0
        %829 = vmatmul.mubr.bf16.gmra.mrb[0].mxu0 %v665
        %v830 = vpop.f32.mrb[0].mxu0
        %v831 = vadd.f32 %v547, %v830
        %v832 = vpop.f32.mrb[0].mxu0
        %v833 = vpop.f32.mrb[0].mxu0
        %v834 = vadd.f32 %v550, %v833
        %v835 = vpop.f32.mrb[0].mxu0
        %836 = vdwg.mxu0
        %v837 = vld [vmem:[%s174] sm:$0xe]
        %s838 = scalar_lea.vmem [#allocation4], 336
        %v839 = vld [vmem:[%s838] sm:$0xff]
        %v840 = vld [vmem:[%s838 + $0x8] sm:$0xff]
        %v841 = vld [vmem:[%s838 + $0x10] sm:$0xff]
        %v842 = vld [vmem:[%s838 + $0x18] sm:$0xf]
        %v843 = vld [vmem:[%s838 + $0x1c] sm:$0xff]
        %v844 = vld [vmem:[%s838 + $0x24] sm:$0xff]
        %v845 = vld [vmem:[%s838 + $0x2c] sm:$0xff]
        %v846 = vld [vmem:[%s838 + $0x34] sm:$0xf]
        %v847 = vld [vmem:[%s838 + $0x38] sm:$0xff]
        %v848 = vld [vmem:[%s838 + $0x40] sm:$0xff]
        %v849 = vld [vmem:[%s838 + $0x48] sm:$0xff]
        %v850 = vld [vmem:[%s838 + $0x50] sm:$0xf]
        %v851 = vld [vmem:[%s838 + $0x54] sm:$0xff]
        %v852 = vld [vmem:[%s838 + $0x5c] sm:$0xff]
        %v853 = vld [vmem:[%s838 + $0x64] sm:$0xff]
        %v854 = vld [vmem:[%s838 + $0x6c] sm:$0xf]
        %v855 = vld [vmem:[%s838 + $0x70] sm:$0xff]
        %v856 = vld [vmem:[%s838 + $0x78] sm:$0xff]
        %v857 = vld [vmem:[%s838 + $0x80] sm:$0xff]
        %v858 = vld [vmem:[%s838 + $0x88] sm:$0xf]
        %v859 = vld [vmem:[%s838 + $0x8c] sm:$0xff]
        %v860 = vld [vmem:[%s838 + $0x94] sm:$0xff]
        %v861 = vld [vmem:[%s838 + $0x9c] sm:$0xff]
        %v862 = vld [vmem:[%s838 + $0xa4] sm:$0xf]
        %v864 = vunpack.c.l.b16 %v837
        %v865 = vpack.c.b16 %v262, %v864
        %v866 = vrot.slane %v865, 1
        %v891 = vunpack.c.l.b16 %v839
        %v892 = vunpack.c.h.b16 %v839
        %v893 = vunpack.c.l.b16 %v840
        %v894 = vunpack.c.h.b16 %v840
        %v895 = vunpack.c.l.b16 %v841
        %v896 = vunpack.c.h.b16 %v841
        %v897 = vunpack.c.l.b16 %v842
        %v898 = vunpack.c.l.b16 %v843
        %v899 = vunpack.c.h.b16 %v843
        %v900 = vunpack.c.l.b16 %v844
        %v901 = vunpack.c.h.b16 %v844
        %v902 = vunpack.c.l.b16 %v845
        %v903 = vunpack.c.h.b16 %v845
        %v904 = vunpack.c.l.b16 %v846
        %v905 = vunpack.c.l.b16 %v847
        %v906 = vunpack.c.h.b16 %v847
        %v907 = vunpack.c.l.b16 %v848
        %v908 = vunpack.c.h.b16 %v848
        %v909 = vunpack.c.l.b16 %v849
        %v910 = vunpack.c.h.b16 %v849
        %v911 = vunpack.c.l.b16 %v850
        %v912 = vunpack.c.l.b16 %v851
        %v913 = vunpack.c.h.b16 %v851
        %v914 = vunpack.c.l.b16 %v852
        %v915 = vunpack.c.h.b16 %v852
        %v916 = vunpack.c.l.b16 %v853
        %v917 = vunpack.c.h.b16 %v853
        %v918 = vunpack.c.l.b16 %v854
        %v919 = vunpack.c.l.b16 %v855
        %v920 = vunpack.c.h.b16 %v855
        %v921 = vunpack.c.l.b16 %v856
        %v922 = vunpack.c.h.b16 %v856
        %v923 = vunpack.c.l.b16 %v857
        %v924 = vunpack.c.h.b16 %v857
        %v925 = vunpack.c.l.b16 %v858
        %v926 = vunpack.c.l.b16 %v859
        %v927 = vunpack.c.h.b16 %v859
        %v928 = vunpack.c.l.b16 %v860
        %v929 = vunpack.c.h.b16 %v860
        %v930 = vunpack.c.l.b16 %v861
        %v931 = vunpack.c.h.b16 %v861
        %v932 = vunpack.c.l.b16 %v862
        %v933 = vpack.c.b16 %v898, %v891
        %v934 = vpack.c.b16 %v899, %v892
        %v935 = vpack.c.b16 %v900, %v893
        %v936 = vpack.c.b16 %v901, %v894
        %v937 = vpack.c.b16 %v902, %v895
        %v938 = vpack.c.b16 %v903, %v896
        %v939 = vpack.c.b16 %v904, %v897
        %v940 = vpack.c.b16 %v912, %v905
        %v941 = vpack.c.b16 %v913, %v906
        %v942 = vpack.c.b16 %v914, %v907
        %v943 = vpack.c.b16 %v915, %v908
        %v944 = vpack.c.b16 %v916, %v909
        %v945 = vpack.c.b16 %v917, %v910
        %v946 = vpack.c.b16 %v918, %v911
        %v947 = vpack.c.b16 %v926, %v919
        %v948 = vpack.c.b16 %v927, %v920
        %v949 = vpack.c.b16 %v928, %v921
        %v950 = vpack.c.b16 %v929, %v922
        %v951 = vpack.c.b16 %v930, %v923
        %v952 = vpack.c.b16 %v931, %v924
        %v953 = vpack.c.b16 %v932, %v925
        %v976 = vsel %vm379, %v866, 0
        %978 = vmatprep.subr.bf16.mxu0 %v934
        %979 = vmatpush1.bf16.msra.mxu0 %v933
        %980 = vmatprep.subr.bf16.mxu0 %v941
        %981 = vmatpush1.bf16.msra.mxu0 %v940
        %982 = vmatprep.subr.bf16.mxu0 %v948
        %983 = vmatpush1.bf16.msra.mxu0 %v947
        %984 = vmatprep.subr.bf16.mxu0 0
        %985 = vmatpush1.bf16.msra.mxu0 0
        %986 = vmatprep.subr.bf16.mxu0 0
        %987 = vmatpush1.bf16.msra.mxu0 0
        %988 = vmatprep.subr.bf16.mxu0 0
        %989 = vmatpush1.bf16.msra.mxu0 0
        %990 = vmatprep.subr.bf16.mxu0 0
        %991 = vmatpush1.bf16.msra.mxu0 0
        %992 = vmatprep.subr.bf16.mxu0 0
        %993 = vmatpush1.bf16.msra.mxu0 0
        %994 = vmatprep.subr.bf16.mxu0 0
        %995 = vmatpush1.bf16.msra.mxu0 0
        %996 = vmatprep.subr.bf16.mxu0 0
        %997 = vmatpush1.bf16.msra.mxu0 0
        %998 = vmatprep.subr.bf16.mxu0 0
        %999 = vmatpush1.bf16.msra.mxu0 0
        %1000 = vmatprep.subr.bf16.mxu0 0
        %1001 = vmatpush1.bf16.msra.mxu0 0
        %1002 = vmatprep.subr.bf16.mxu0 0
        %1003 = vmatpush1.bf16.msra.mxu0 0
        %1004 = vmatprep.subr.bf16.mxu0 0
        %1005 = vmatpush1.bf16.msra.mxu0 0
        %1006 = vmatprep.subr.bf16.mxu0 0
        %1007 = vmatpush1.bf16.msra.mxu0 0
        %1008 = vmatprep.subr.bf16.mxu0 0
        %1009 = vmatpush1.bf16.msra.mxu0 0
        %1010 = vmatprep.mubr.bf16.mxu0 0
        %1011 = vmatmul.mubr.bf16.gmra.mrb[0].mxu0 %v976
        %v1012 = vpop.f32.mrb[0].mxu0
        %v1013 = vadd.f32 0.0, %v1012
        %v1014 = vpop.f32.mrb[0].mxu0
        %v1015 = vadd.f32 0.0, %v1014
        %v1016 = vpop.f32.mrb[0].mxu0
        %v1017 = vadd.f32 0.0, %v1016
        %v1018 = vpop.f32.mrb[0].mxu0
        %v1019 = vadd.f32 0.0, %v1018
        %1020 = vdwg.mxu0
        %1021 = vmatprep.subr.bf16.mxu0 %v936
        %1022 = vmatpush1.bf16.msra.mxu0 %v935
        %1023 = vmatprep.subr.bf16.mxu0 %v943
        %1024 = vmatpush1.bf16.msra.mxu0 %v942
        %1025 = vmatprep.subr.bf16.mxu0 %v950
        %1026 = vmatpush1.bf16.msra.mxu0 %v949
        %1027 = vmatprep.subr.bf16.mxu0 0
        %1028 = vmatpush1.bf16.msra.mxu0 0
        %1029 = vmatprep.subr.bf16.mxu0 0
        %1030 = vmatpush1.bf16.msra.mxu0 0
        %1031 = vmatprep.subr.bf16.mxu0 0
        %1032 = vmatpush1.bf16.msra.mxu0 0
        %1033 = vmatprep.subr.bf16.mxu0 0
        %1034 = vmatpush1.bf16.msra.mxu0 0
        %1035 = vmatprep.subr.bf16.mxu0 0
        %1036 = vmatpush1.bf16.msra.mxu0 0
        %1037 = vmatprep.subr.bf16.mxu0 0
        %1038 = vmatpush1.bf16.msra.mxu0 0
        %1039 = vmatprep.subr.bf16.mxu0 0
        %1040 = vmatpush1.bf16.msra.mxu0 0
        %1041 = vmatprep.subr.bf16.mxu0 0
        %1042 = vmatpush1.bf16.msra.mxu0 0
        %1043 = vmatprep.subr.bf16.mxu0 0
        %1044 = vmatpush1.bf16.msra.mxu0 0
        %1045 = vmatprep.subr.bf16.mxu0 0
        %1046 = vmatpush1.bf16.msra.mxu0 0
        %1047 = vmatprep.subr.bf16.mxu0 0
        %1048 = vmatpush1.bf16.msra.mxu0 0
        %1049 = vmatprep.subr.bf16.mxu0 0
        %1050 = vmatpush1.bf16.msra.mxu0 0
        %1051 = vmatprep.subr.bf16.mxu0 0
        %1052 = vmatpush1.bf16.msra.mxu0 0
        %1053 = vmatprep.mubr.bf16.mxu0 0
        %1054 = vmatmul.mubr.bf16.gmra.mrb[0].mxu0 %v976
        %v1055 = vpop.f32.mrb[0].mxu0
        %v1056 = vadd.f32 0.0, %v1055
        %v1057 = vpop.f32.mrb[0].mxu0
        %v1058 = vadd.f32 0.0, %v1057
        %v1059 = vpop.f32.mrb[0].mxu0
        %v1060 = vadd.f32 0.0, %v1059
        %v1061 = vpop.f32.mrb[0].mxu0
        %v1062 = vadd.f32 0.0, %v1061
        %1063 = vdwg.mxu0
        %1064 = vmatprep.subr.bf16.mxu0 %v938
        %1065 = vmatpush1.bf16.msra.mxu0 %v937
        %1066 = vmatprep.subr.bf16.mxu0 %v945
        %1067 = vmatpush1.bf16.msra.mxu0 %v944
        %1068 = vmatprep.subr.bf16.mxu0 %v952
        %1069 = vmatpush1.bf16.msra.mxu0 %v951
        %1070 = vmatprep.subr.bf16.mxu0 0
        %1071 = vmatpush1.bf16.msra.mxu0 0
        %1072 = vmatprep.subr.bf16.mxu0 0
        %1073 = vmatpush1.bf16.msra.mxu0 0
        %1074 = vmatprep.subr.bf16.mxu0 0
        %1075 = vmatpush1.bf16.msra.mxu0 0
        %1076 = vmatprep.subr.bf16.mxu0 0
        %1077 = vmatpush1.bf16.msra.mxu0 0
        %1078 = vmatprep.subr.bf16.mxu0 0
        %1079 = vmatpush1.bf16.msra.mxu0 0
        %1080 = vmatprep.subr.bf16.mxu0 0
        %1081 = vmatpush1.bf16.msra.mxu0 0
        %1082 = vmatprep.subr.bf16.mxu0 0
        %1083 = vmatpush1.bf16.msra.mxu0 0
        %1084 = vmatprep.subr.bf16.mxu0 0
        %1085 = vmatpush1.bf16.msra.mxu0 0
        %1086 = vmatprep.subr.bf16.mxu0 0
        %1087 = vmatpush1.bf16.msra.mxu0 0
        %1088 = vmatprep.subr.bf16.mxu0 0
        %1089 = vmatpush1.bf16.msra.mxu0 0
        %1090 = vmatprep.subr.bf16.mxu0 0
        %1091 = vmatpush1.bf16.msra.mxu0 0
        %1092 = vmatprep.subr.bf16.mxu0 0
        %1093 = vmatpush1.bf16.msra.mxu0 0
        %1094 = vmatprep.subr.bf16.mxu0 0
        %1095 = vmatpush1.bf16.msra.mxu0 0
        %1096 = vmatprep.mubr.bf16.mxu0 0
        %1097 = vmatmul.mubr.bf16.gmra.mrb[0].mxu0 %v976
        %v1098 = vpop.f32.mrb[0].mxu0
        %v1099 = vadd.f32 0.0, %v1098
        %v1100 = vpop.f32.mrb[0].mxu0
        %v1101 = vadd.f32 0.0, %v1100
        %v1102 = vpop.f32.mrb[0].mxu0
        %v1103 = vadd.f32 0.0, %v1102
        %v1104 = vpop.f32.mrb[0].mxu0
        %v1105 = vadd.f32 0.0, %v1104
        %1106 = vdwg.mxu0
        %1107 = vmatprep.subr.bf16.mxu0 0
        %1108 = vmatpush1.bf16.msra.mxu0 %v939
        %1109 = vmatprep.subr.bf16.mxu0 0
        %1110 = vmatpush1.bf16.msra.mxu0 %v946
        %1111 = vmatprep.subr.bf16.mxu0 0
        %1112 = vmatpush1.bf16.msra.mxu0 %v953
        %1113 = vmatprep.subr.bf16.mxu0 0
        %1114 = vmatpush1.bf16.msra.mxu0 0
        %1115 = vmatprep.subr.bf16.mxu0 0
        %1116 = vmatpush1.bf16.msra.mxu0 0
        %1117 = vmatprep.subr.bf16.mxu0 0
        %1118 = vmatpush1.bf16.msra.mxu0 0
        %1119 = vmatprep.subr.bf16.mxu0 0
        %1120 = vmatpush1.bf16.msra.mxu0 0
        %1121 = vmatprep.subr.bf16.mxu0 0
        %1122 = vmatpush1.bf16.msra.mxu0 0
        %1123 = vmatprep.subr.bf16.mxu0 0
        %1124 = vmatpush1.bf16.msra.mxu0 0
        %1125 = vmatprep.subr.bf16.mxu0 0
        %1126 = vmatpush1.bf16.msra.mxu0 0
        %1127 = vmatprep.subr.bf16.mxu0 0
        %1128 = vmatpush1.bf16.msra.mxu0 0
        %1129 = vmatprep.subr.bf16.mxu0 0
        %1130 = vmatpush1.bf16.msra.mxu0 0
        %1131 = vmatprep.subr.bf16.mxu0 0
        %1132 = vmatpush1.bf16.msra.mxu0 0
        %1133 = vmatprep.subr.bf16.mxu0 0
        %1134 = vmatpush1.bf16.msra.mxu0 0
        %1135 = vmatprep.subr.bf16.mxu0 0
        %1136 = vmatpush1.bf16.msra.mxu0 0
        %1137 = vmatprep.subr.bf16.mxu0 0
        %1138 = vmatpush1.bf16.msra.mxu0 0
        %1139 = vmatprep.mubr.bf16.mxu0 0
        %1140 = vmatmul.mubr.bf16.gmra.mrb[0].mxu0 %v976
        %v1141 = vpop.f32.mrb[0].mxu0
        %v1142 = vadd.f32 0.0, %v1141
        %v1143 = vpop.f32.mrb[0].mxu0
        %v1144 = vpop.f32.mrb[0].mxu0
        %v1145 = vadd.f32 0.0, %v1144
        %v1146 = vpop.f32.mrb[0].mxu0
        %1147 = vdwg.mxu0
        %v1148 = vadd.f32 %v702, %v1013
        %v1149 = vadd.f32 %v704, %v1015
        %v1150 = vadd.f32 %v745, %v1056
        %v1151 = vadd.f32 %v747, %v1058
        %v1152 = vadd.f32 %v788, %v1099
        %v1153 = vadd.f32 %v790, %v1101
        %v1154 = vadd.f32 %v831, %v1142
        %v1155 = vadd.f32 %v706, %v1017
        %v1156 = vadd.f32 %v708, %v1019
        %v1157 = vadd.f32 %v749, %v1060
        %v1158 = vadd.f32 %v751, %v1062
        %v1159 = vadd.f32 %v792, %v1103
        %v1160 = vadd.f32 %v794, %v1105
        %v1161 = vadd.f32 %v834, %v1145
        %v1162 = vld [vmem:[%s2] sm:$0xff]
        %v1164 = vlaneseq
        %v1165 = vshrl.u32 %v1164, 7
        %v1166 = vsub.s32 0, %v1165
        %v1167 = vrot.slane %v1162, %v1166
        %v1168 = vlaneseq
        %v1169 = vshrl.u32 %v1168, 7
        %v1170 = vsub.s32 1, %v1169
        %v1171 = vrot.slane %v1162, %v1170
        %v1172 = vlaneseq
        %v1173 = vshrl.u32 %v1172, 7
        %v1174 = vsub.s32 2, %v1173
        %v1175 = vrot.slane %v1162, %v1174
        %v1176 = vlaneseq
        %v1177 = vshrl.u32 %v1176, 7
        %v1178 = vsub.s32 3, %v1177
        %v1179 = vrot.slane %v1162, %v1178
        %v1180 = vlaneseq
        %v1181 = vshrl.u32 %v1180, 7
        %v1182 = vsub.s32 4, %v1181
        %v1183 = vrot.slane %v1162, %v1182
        %v1184 = vlaneseq
        %v1185 = vshrl.u32 %v1184, 7
        %v1186 = vsub.s32 5, %v1185
        %v1187 = vrot.slane %v1162, %v1186
        %v1188 = vlaneseq
        %v1189 = vshrl.u32 %v1188, 7
        %v1190 = vsub.s32 6, %v1189
        %v1191 = vrot.slane %v1162, %v1190
        %v1199 = vadd.f32 %v1148, %v1167
        %v1200 = vadd.f32 %v1149, %v1171
        %v1201 = vadd.f32 %v1150, %v1175
        %v1202 = vadd.f32 %v1151, %v1179
        %v1203 = vadd.f32 %v1152, %v1183
        %v1204 = vadd.f32 %v1153, %v1187
        %v1205 = vadd.f32 %v1154, %v1191
        %v1206 = vadd.f32 %v1155, %v1167
        %v1207 = vadd.f32 %v1156, %v1171
        %v1208 = vadd.f32 %v1157, %v1175
        %v1209 = vadd.f32 %v1158, %v1179
        %v1210 = vadd.f32 %v1159, %v1183
        %v1211 = vadd.f32 %v1160, %v1187
        %v1212 = vadd.f32 %v1161, %v1191
        %1213 = vst [vmem:[%s205] sm:$0xff] %v1199
        %1214 = vst [vmem:[%s205 + $0x8] sm:$0xff] %v1200
        %1215 = vst [vmem:[%s205 + $0x10] sm:$0xff] %v1201
        %1216 = vst [vmem:[%s205 + $0x18] sm:$0xff] %v1202
        %1217 = vst [vmem:[%s205 + $0x20] sm:$0xff] %v1203
        %1218 = vst [vmem:[%s205 + $0x28] sm:$0xff] %v1204
        %1219 = vst [vmem:[%s205 + $0x30] sm:$0xff] %v1205
        %1220 = vst [vmem:[%s205 + $0x38] sm:$0x3f] %v1206
        %1221 = vst [vmem:[%s205 + $0x40] sm:$0x3f] %v1207
        %1222 = vst [vmem:[%s205 + $0x48] sm:$0x3f] %v1208
        %1223 = vst [vmem:[%s205 + $0x50] sm:$0x3f] %v1209
        %1224 = vst [vmem:[%s205 + $0x58] sm:$0x3f] %v1210
        %1225 = vst [vmem:[%s205 + $0x60] sm:$0x3f] %v1211
        %1226 = vst [vmem:[%s205 + $0x68] sm:$0x3f] %v1212
        %p1227 = scmp.lt.s32.totalorder %s18, 1
        %s1228 = scalar_select %p1227, %s18, 1
        %s1229 = smul.addr %s1228, 14
        %s1230 = smul.addr %s1229, 8
        %s1231 = scalar_lea.vmem %s3, %s1230
        // Predicated region
        $region41: #{tpu_custom_call.1} parent=31 // pred_check
          %p1232 = pneg %p104
        $region42: #{tpu_custom_call.1} parent=31 // pred_check_branch
          %1234 = sbr.rel (%p1232) target = $region44
        $region43: #{tpu_custom_call.1} parent=31 // pred_region
          _
        $region44: #{tpu_custom_call.1} parent=31 // pred_fallthru
          _
      $region32: #{tpu_custom_call.1} parent=5 // pred_fallthru
        _
      %p1235 = scmp.le.s32.totalorder 2, %s13
      // Predicated region
      $region45: #{tpu_custom_call.1} parent=5 // pred_check
        %p1236 = pneg %p1235
      $region46: #{tpu_custom_call.1} parent=5 // pred_check_branch
        %1238 = sbr.rel (%p1236) target = $region48
      $region47: #{tpu_custom_call.1} parent=5 // pred_region
        %s1239 = ssub.s32 %s13, 2
        // Predicated region
        $region49: #{tpu_custom_call.1} parent=47 // pred_check
          %p1240 = pneg %p110
        $region50: #{tpu_custom_call.1} parent=47 // pred_check_branch
          %1242 = sbr.rel (%p1240) target = $region52
        $region51: #{tpu_custom_call.1} parent=47 // pred_region
          %p1243 = scmp.lt.s32.totalorder %s19, 1
          %s1244 = scalar_select %p1243, %s19, 1
          %s1245 = smul.addr %s1244, 14
          %s1246 = smul.addr %s1245, 8
          %s1247 = scalar_lea.vmem %s3, %s1246
        $region52: #{tpu_custom_call.1} parent=47 // pred_fallthru
          _
      $region48: #{tpu_custom_call.1} parent=5 // pred_fallthru
        _
    $region6: #{tpu_custom_call.1} parent=1 // loop_footer
      %s17 = sadd.s32 1, %s13
    $region7: #{tpu_custom_call.1} parent=1 // loop_footer_branch
      %12 = sbr.rel target = $region3
    $region8: #{tpu_custom_call.1} parent=1 // loop_exit
      _
    %1248 = vsyncpa [#allocation3], 1
    %s1249 = scalar_lea.sflag [#allocation3], 1
    %1250 = vsyncpa %s1249, 1
    %1251 = vsyncpa [#allocation5], 1

</llo_original>
